<compile_context>
chip_gen: v7x
topology: tpu7x:2x2x1
jax: 0.10.0
libtpu: 0.0.40
codegen_flags: <defaults>
</compile_context>

<pallas_src>
import jax
import jax.numpy as jnp
from jax.experimental import pallas as pl
from jax.experimental.pallas import tpu as pltpu


def _round_up(n, m):
    return ((n + m - 1) // m) * m


def mlp_kernel(x_ref, w_in_ref, b_in_ref, w_h_ref, b_h_ref,
               w_out_ref, b_out_ref, o_ref):
    # fc_in + tanh : bf16 operands on the MXU, f32 accumulation.
    h = jnp.dot(x_ref[...].astype(jnp.bfloat16), w_in_ref[...],
                preferred_element_type=jnp.float32)
    h = jnp.tanh(h + b_in_ref[...])
    # fc_list[0] + tanh
    h = jnp.dot(h.astype(jnp.bfloat16), w_h_ref[...],
                preferred_element_type=jnp.float32)
    h = jnp.tanh(h + b_h_ref[...])
    # fc_out (no activation)
    o = jnp.dot(h.astype(jnp.bfloat16), w_out_ref[...],
                preferred_element_type=jnp.float32)
    o_ref[...] = (o + b_out_ref[...]).astype(o_ref.dtype)


def mlp_forward(x, params, n_input=7, block_b=1024):
    # PyTorch's x.view(-1, n_input) -- glue reshape stays in plain JAX.
    x2d = x.reshape(-1, n_input).astype(jnp.float32)
    B = x2d.shape[0]
    size_h = params["w_in"].shape[1]
    n_output = params["w_out"].shape[1]

    # Batch tile: multiple of 8 sublanes, capped at block_b rows per step.
    TB = min(block_b, _round_up(B, 8))
    B_pad = _round_up(B, TB)
    if B_pad != B:
        x2d = jnp.pad(x2d, ((0, B_pad - B), (0, 0)))
    grid = (B_pad // TB,)

    # Advisory cost estimate so XLA schedules the custom call sensibly.
    w_bytes = sum(int(params[k].size) * int(params[k].dtype.itemsize)
                  for k in ("w_in", "w_h", "w_out", "b_in", "b_h", "b_out"))
    cost = pl.CostEstimate(
        flops=2 * B_pad * (n_input * size_h + size_h * size_h + size_h * n_output),
        transcendentals=2 * B_pad * size_h,
        bytes_accessed=B_pad * 4 * (n_input + n_output) + w_bytes,
    )

    out = pl.pallas_call(
        mlp_kernel,
        out_shape=jax.ShapeDtypeStruct((B_pad, n_output), jnp.float32),
        grid_spec=pltpu.PrefetchScalarGridSpec(
            num_scalar_prefetch=0,
            grid=grid,
            in_specs=[
                pl.BlockSpec((TB, n_input), lambda i: (i, 0)),       # x tile
                pl.BlockSpec((n_input, size_h), lambda i: (0, 0)),   # w_in (resident)
                pl.BlockSpec((1, size_h), lambda i: (0, 0)),         # b_in
                pl.BlockSpec((size_h, size_h), lambda i: (0, 0)),    # w_h
                pl.BlockSpec((1, size_h), lambda i: (0, 0)),         # b_h
                pl.BlockSpec((size_h, n_output), lambda i: (0, 0)),  # w_out
                pl.BlockSpec((1, n_output), lambda i: (0, 0)),       # b_out
            ],
            out_specs=pl.BlockSpec((TB, n_output), lambda i: (i, 0)),
        ),
        compiler_params=pltpu.CompilerParams(
            dimension_semantics=("parallel",),      # shard batch over v7x's 2 TCs
            vmem_limit_bytes=32 * 1024 * 1024,      # safe on v5e/v6e/v7x
        ),
        cost_estimate=cost,
    )(
        x2d,
        params["w_in"], params["b_in"],
        params["w_h"], params["b_h"],
        params["w_out"], params["b_out"],
    )
    # Slice off the padded rows (no-op when B was already a tile multiple).
    return out if B_pad == B else out[:B]


def init_params(key, n_input=7, n_output=6, size_h=128):
    """Deterministic synthetic init matching the module's shapes.

    Weights ~ U(-0.1, 0.1) (as in the module's __init__), stored bf16
    (in_features, out_features) for the bf16-native MXU path;
    biases ~ U(-1/sqrt(fan_in), 1/sqrt(fan_in)) (PyTorch Linear default), f32.
    """
    ks = jax.random.split(key, 6)

    def u(k, shape, lo, hi, dtype=jnp.float32):
        return jax.random.uniform(k, shape, jnp.float32, lo, hi).astype(dtype)

    b_in_bound = 1.0 / (n_input ** 0.5)
    b_h_bound = 1.0 / (size_h ** 0.5)
    return {
        "w_in":  u(ks[0], (n_input, size_h), -0.1, 0.1, jnp.bfloat16),
        "b_in":  u(ks[1], (1, size_h), -b_in_bound, b_in_bound),
        "w_h":   u(ks[2], (size_h, size_h), -0.1, 0.1, jnp.bfloat16),
        "b_h":   u(ks[3], (1, size_h), -b_h_bound, b_h_bound),
        "w_out": u(ks[4], (size_h, n_output), -0.1, 0.1, jnp.bfloat16),
        "b_out": u(ks[5], (1, n_output), -b_h_bound, b_h_bound),
    }


if __name__ == "__main__":
    n_input, n_output, size_h = 7, 6, 128
    key = jax.random.PRNGKey(0)
    pkey, xkey = jax.random.split(key)

    params = init_params(pkey, n_input=n_input, n_output=n_output, size_h=size_h)

    # Input with extra leading dims to exercise the .view(-1, n_input) flatten.
    x = jax.random.normal(xkey, (2, 4, n_input), dtype=jnp.float32)

    out = mlp_forward(x, params, n_input=n_input)
    out = jax.block_until_ready(out)

    # Pure-JAX reference mirroring the kernel's bf16-operand / f32-accumulate path.
    x2d = x.reshape(-1, n_input)
    h = jnp.tanh(jnp.dot(x2d.astype(jnp.bfloat16), params["w_in"],
                         preferred_element_type=jnp.float32) + params["b_in"])
    h = jnp.tanh(jnp.dot(h.astype(jnp.bfloat16), params["w_h"],
                         preferred_element_type=jnp.float32) + params["b_h"])
    ref_bf16 = jnp.dot(h.astype(jnp.bfloat16), params["w_out"],
                       preferred_element_type=jnp.float32) + params["b_out"]

    # Full-f32 reference (looser tolerance: bf16 rounding of activations).
    h32 = jnp.tanh(x2d @ params["w_in"].astype(jnp.float32) + params["b_in"])
    h32 = jnp.tanh(h32 @ params["w_h"].astype(jnp.float32) + params["b_h"])
    ref_f32 = h32 @ params["w_out"].astype(jnp.float32) + params["b_out"]

    assert out.shape == (8, n_output)
    assert jnp.allclose(out, ref_bf16, atol=1e-4, rtol=1e-3)
    assert jnp.allclose(out, ref_f32, atol=2e-2, rtol=2e-2)

    print("KERNEL_OK")
</pallas_src>

<mosaic_0001>
module attributes {stable_mosaic.version = 11 : i64} {
  func.func @mlp_kernel(%arg0: i32, %arg1: memref<8x7xf32, #tpu.memory_space<vmem>>, %arg2: memref<7x128xbf16, #tpu.memory_space<vmem>>, %arg3: memref<1x128xf32, #tpu.memory_space<vmem>>, %arg4: memref<128x128xbf16, #tpu.memory_space<vmem>>, %arg5: memref<1x128xf32, #tpu.memory_space<vmem>>, %arg6: memref<128x6xbf16, #tpu.memory_space<vmem>>, %arg7: memref<1x6xf32, #tpu.memory_space<vmem>>, %arg8: memref<8x6xf32, #tpu.memory_space<vmem>>) attributes {dimension_semantics = [#tpu.dimension_semantics<parallel>], iteration_bounds = array<i64: 1>, scalar_prefetch = 0 : i64, scratch_operands = 0 : i64, tpu.core_type = #tpu.core_type<tc>, window_params = [{transform_indices = @transform_0, window_bounds = array<i64: 8, 7>}, {pipeline_mode = #tpu.pipeline_mode<synchronous>, transform_indices = @transform_1, window_bounds = array<i64: 7, 128>}, {pipeline_mode = #tpu.pipeline_mode<synchronous>, transform_indices = @transform_2, window_bounds = array<i64: 1, 128>}, {pipeline_mode = #tpu.pipeline_mode<synchronous>, transform_indices = @transform_3, window_bounds = array<i64: 128, 128>}, {pipeline_mode = #tpu.pipeline_mode<synchronous>, transform_indices = @transform_4, window_bounds = array<i64: 1, 128>}, {pipeline_mode = #tpu.pipeline_mode<synchronous>, transform_indices = @transform_5, window_bounds = array<i64: 128, 6>}, {pipeline_mode = #tpu.pipeline_mode<synchronous>, transform_indices = @transform_6, window_bounds = array<i64: 1, 6>}, {transform_indices = @transform_7, window_bounds = array<i64: 8, 6>}]} {
    %c0 = arith.constant 0 : index
    %c0_0 = arith.constant 0 : index
    %0 = vector.load %arg1[%c0, %c0_0] : memref<8x7xf32, #tpu.memory_space<vmem>>, vector<8x7xf32>
    %1 = arith.truncf %0 : vector<8x7xf32> to vector<8x7xbf16>
    %c0_1 = arith.constant 0 : index
    %c0_2 = arith.constant 0 : index
    %2 = vector.load %arg2[%c0_1, %c0_2] : memref<7x128xbf16, #tpu.memory_space<vmem>>, vector<7x128xbf16>
    %cst = arith.constant dense<0.000000e+00> : vector<8x128xf32>
    %3 = tpu.matmul %1, %2, %cst {dimension_numbers = #tpu.dot_dimension_numbers<[1], [0], [0], [1], [0, 0, 1, 1], [], []>} : vector<8x7xbf16>, vector<7x128xbf16>, vector<8x128xf32> -> vector<8x128xf32>
    %c0_3 = arith.constant 0 : index
    %c0_4 = arith.constant 0 : index
    %4 = vector.load %arg3[%c0_3, %c0_4] : memref<1x128xf32, #tpu.memory_space<vmem>>, vector<1x128xf32>
    %5 = vector.broadcast %4 : vector<1x128xf32> to vector<8x128xf32>
    %6 = arith.addf %3, %5 : vector<8x128xf32>
    %7 = math.tanh %6 : vector<8x128xf32>
    %8 = arith.truncf %7 : vector<8x128xf32> to vector<8x128xbf16>
    %c0_5 = arith.constant 0 : index
    %c0_6 = arith.constant 0 : index
    %9 = vector.load %arg4[%c0_5, %c0_6] : memref<128x128xbf16, #tpu.memory_space<vmem>>, vector<128x128xbf16>
    %cst_7 = arith.constant dense<0.000000e+00> : vector<8x128xf32>
    %10 = tpu.matmul %8, %9, %cst_7 {dimension_numbers = #tpu.dot_dimension_numbers<[1], [0], [0], [1], [0, 0, 1, 1], [], []>} : vector<8x128xbf16>, vector<128x128xbf16>, vector<8x128xf32> -> vector<8x128xf32>
    %c0_8 = arith.constant 0 : index
    %c0_9 = arith.constant 0 : index
    %11 = vector.load %arg5[%c0_8, %c0_9] : memref<1x128xf32, #tpu.memory_space<vmem>>, vector<1x128xf32>
    %12 = vector.broadcast %11 : vector<1x128xf32> to vector<8x128xf32>
    %13 = arith.addf %10, %12 : vector<8x128xf32>
    %14 = math.tanh %13 : vector<8x128xf32>
    %15 = arith.truncf %14 : vector<8x128xf32> to vector<8x128xbf16>
    %c0_10 = arith.constant 0 : index
    %c0_11 = arith.constant 0 : index
    %16 = vector.load %arg6[%c0_10, %c0_11] : memref<128x6xbf16, #tpu.memory_space<vmem>>, vector<128x6xbf16>
    %cst_12 = arith.constant dense<0.000000e+00> : vector<8x6xf32>
    %17 = tpu.matmul %15, %16, %cst_12 {dimension_numbers = #tpu.dot_dimension_numbers<[1], [0], [0], [1], [0, 0, 1, 1], [], []>} : vector<8x128xbf16>, vector<128x6xbf16>, vector<8x6xf32> -> vector<8x6xf32>
    %c0_13 = arith.constant 0 : index
    %c0_14 = arith.constant 0 : index
    %18 = vector.load %arg7[%c0_13, %c0_14] : memref<1x6xf32, #tpu.memory_space<vmem>>, vector<1x6xf32>
    %19 = vector.broadcast %18 : vector<1x6xf32> to vector<8x6xf32>
    %20 = arith.addf %17, %19 : vector<8x6xf32>
    %c0_15 = arith.constant 0 : index
    %c0_16 = arith.constant 0 : index
    %21 = vector.load %arg8[%c0_15, %c0_16] : memref<8x6xf32, #tpu.memory_space<vmem>>, vector<8x6xf32>
    tpu.vector_store %arg8[%c0_15, %c0_16], %20 {strides = array<i32>} : memref<8x6xf32, #tpu.memory_space<vmem>>, vector<8x6xf32>,
    return
  }
  func.func @transform_0(%arg0: i32) -> (i32, i32) {
    %c0_i32 = arith.constant 0 : i32
    %c0_i32_0 = arith.constant 0 : i32
    return %arg0, %c0_i32 : i32, i32
  }
  func.func @transform_1(%arg0: i32) -> (i32, i32) {
    %c0_i32 = arith.constant 0 : i32
    %c0_i32_0 = arith.constant 0 : i32
    %c0_i32_1 = arith.constant 0 : i32
    return %c0_i32, %c0_i32_0 : i32, i32
  }
  func.func @transform_2(%arg0: i32) -> (i32, i32) {
    %c0_i32 = arith.constant 0 : i32
    %c0_i32_0 = arith.constant 0 : i32
    %c0_i32_1 = arith.constant 0 : i32
    return %c0_i32, %c0_i32_0 : i32, i32
  }
  func.func @transform_3(%arg0: i32) -> (i32, i32) {
    %c0_i32 = arith.constant 0 : i32
    %c0_i32_0 = arith.constant 0 : i32
    %c0_i32_1 = arith.constant 0 : i32
    return %c0_i32, %c0_i32_0 : i32, i32
  }
  func.func @transform_4(%arg0: i32) -> (i32, i32) {
    %c0_i32 = arith.constant 0 : i32
    %c0_i32_0 = arith.constant 0 : i32
    %c0_i32_1 = arith.constant 0 : i32
    return %c0_i32, %c0_i32_0 : i32, i32
  }
  func.func @transform_5(%arg0: i32) -> (i32, i32) {
    %c0_i32 = arith.constant 0 : i32
    %c0_i32_0 = arith.constant 0 : i32
    %c0_i32_1 = arith.constant 0 : i32
    return %c0_i32, %c0_i32_0 : i32, i32
  }
  func.func @transform_6(%arg0: i32) -> (i32, i32) {
    %c0_i32 = arith.constant 0 : i32
    %c0_i32_0 = arith.constant 0 : i32
    %c0_i32_1 = arith.constant 0 : i32
    return %c0_i32, %c0_i32_0 : i32, i32
  }
  func.func @transform_7(%arg0: i32) -> (i32, i32) {
    %c0_i32 = arith.constant 0 : i32
    %c0_i32_0 = arith.constant 0 : i32
    return %arg0, %c0_i32 : i32, i32
  }
}

</mosaic_0001>

<llo_original>
// kernel: tpu_custom_call.1
$region0: #{tpu_custom_call.1}
  #allocation0 [shape = 'u32[]', space=smem, size = 0x4, offset = 0x4, fixed_abs, tag = 'smem constant byte address 0x4 - core index']
  #allocation1 [shape = 'u32[144,128]{1,0:T(1,128)}', space=vmem, size = 0x12000, scoped, tag = 'internal scratch']
  %s0 = inlined_call_operand.vmem [shape: f32[8,7], index: 0, kind: input, shape index: {}]
  %s1 = inlined_call_operand.vmem [shape: bf16[7,128], index: 1, kind: input, shape index: {}]
  %s2 = inlined_call_operand.vmem [shape: f32[1,128], index: 2, kind: input, shape index: {}]
  %s3 = inlined_call_operand.vmem [shape: bf16[128,128], index: 3, kind: input, shape index: {}]
  %s4 = inlined_call_operand.vmem [shape: f32[1,128], index: 4, kind: input, shape index: {}]
  %s5 = inlined_call_operand.vmem [shape: bf16[128,6], index: 5, kind: input, shape index: {}]
  %s6 = inlined_call_operand.vmem [shape: f32[1,6], index: 6, kind: input, shape index: {}]
  %s7 = inlined_call_operand.hbm [shape: f32[8,6], index: 7, kind: output, shape index: {}]
  %s8 = sld [smem:[#allocation0]]
  $region38: #{tpu_custom_call.1} parent=0
    _
  %s10 = ssub.s32 1, %s8
  %s11 = scalar_select 0, %s10, %s8
  $region1: #{tpu_custom_call.1} parent=0
    #allocation2 [shape = 'u8[4096]{0}', space=vmem, size = 0x1000, scoped, tag = 'output window, operand 0, single buffered']
    #allocation3 [shape = 's32[1]{0}', space=sflag, size = 0x4, scoped, tag = 'scoped memory for tpu_custom_call.1']
    %12 = vsyncpa [#allocation3], 0
    // Predicated region
    $region2: #{tpu_custom_call.1} parent=1 // pred_check
      _
    $region3: #{tpu_custom_call.1} parent=1 // pred_check_branch
      %14 = sbr.rel (0) target = $region5
    $region4: #{tpu_custom_call.1} parent=1 // pred_region
      _
    $region5: #{tpu_custom_call.1} parent=1 // pred_fallthru
      _
    // Predicated region
    $region6: #{tpu_custom_call.1} parent=1 // pred_check
      _
    $region7: #{tpu_custom_call.1} parent=1 // pred_check_branch
      %16 = sbr.rel (0) target = $region9
    $region8: #{tpu_custom_call.1} parent=1 // pred_region
      _
    $region9: #{tpu_custom_call.1} parent=1 // pred_fallthru
      _
    // Predicated region
    $region10: #{tpu_custom_call.1} parent=1 // pred_check
      _
    $region11: #{tpu_custom_call.1} parent=1 // pred_check_branch
      %18 = sbr.rel (0) target = $region13
    $region12: #{tpu_custom_call.1} parent=1 // pred_region
      _
    $region13: #{tpu_custom_call.1} parent=1 // pred_fallthru
      _
    // Predicated region
    $region14: #{tpu_custom_call.1} parent=1 // pred_check
      _
    $region15: #{tpu_custom_call.1} parent=1 // pred_check_branch
      %20 = sbr.rel (0) target = $region17
    $region16: #{tpu_custom_call.1} parent=1 // pred_region
      _
    $region17: #{tpu_custom_call.1} parent=1 // pred_fallthru
      _
    // Predicated region
    $region18: #{tpu_custom_call.1} parent=1 // pred_check
      _
    $region19: #{tpu_custom_call.1} parent=1 // pred_check_branch
      %22 = sbr.rel (0) target = $region21
    $region20: #{tpu_custom_call.1} parent=1 // pred_region
      _
    $region21: #{tpu_custom_call.1} parent=1 // pred_fallthru
      _
    // Predicated region
    $region22: #{tpu_custom_call.1} parent=1 // pred_check
      _
    $region23: #{tpu_custom_call.1} parent=1 // pred_check_branch
      %24 = sbr.rel (0) target = $region25
    $region24: #{tpu_custom_call.1} parent=1 // pred_region
      _
    $region25: #{tpu_custom_call.1} parent=1 // pred_fallthru
      _
    // Predicated region
    $region26: #{tpu_custom_call.1} parent=1 // pred_check
      _
    $region27: #{tpu_custom_call.1} parent=1 // pred_check_branch
      %26 = sbr.rel (0) target = $region29
    $region28: #{tpu_custom_call.1} parent=1 // pred_region
      _
    $region29: #{tpu_custom_call.1} parent=1 // pred_fallthru
      _
    %v28 = vld [vmem:[%s0] sm:$0xff]
    %v29 = vpack.c.bf16 %v28, %v28
    %v30 = vld [vmem:[%s1] sm:$0xf]
    %v31 = vld [vmem:[%s2] sm:$0x1]
    %v33 = vlaneseq
    %v34 = vshrl.u32 %v33, 7
    %v35 = vsub.s32 0, %v34
    %v36 = vrot.slane %v31, %v35
    %vm38 = vcmask 56320
    %v40 = vsel %vm38, %v29, 0
    %vm42 = vcmask 1042432
    %vm43 = vcmask 1043456
    %v44 = vsel %vm42, 4294967295, 65535
    %v45 = vsel %vm43, %v44, 0
    %v47 = vand.u32 %v30, %v45
    %49 = vmatprep.subr.bf16.mxu0 0
    %50 = vmatpush1.bf16.msra.mxu0 %v47
    %51 = vmatprep.subr.bf16.mxu0 0
    %52 = vmatpush1.bf16.msra.mxu0 0
    %53 = vmatprep.subr.bf16.mxu0 0
    %54 = vmatpush1.bf16.msra.mxu0 0
    %55 = vmatprep.subr.bf16.mxu0 0
    %56 = vmatpush1.bf16.msra.mxu0 0
    %57 = vmatprep.subr.bf16.mxu0 0
    %58 = vmatpush1.bf16.msra.mxu0 0
    %59 = vmatprep.subr.bf16.mxu0 0
    %60 = vmatpush1.bf16.msra.mxu0 0
    %61 = vmatprep.subr.bf16.mxu0 0
    %62 = vmatpush1.bf16.msra.mxu0 0
    %63 = vmatprep.subr.bf16.mxu0 0
    %64 = vmatpush1.bf16.msra.mxu0 0
    %65 = vmatprep.subr.bf16.mxu0 0
    %66 = vmatpush1.bf16.msra.mxu0 0
    %67 = vmatprep.subr.bf16.mxu0 0
    %68 = vmatpush1.bf16.msra.mxu0 0
    %69 = vmatprep.subr.bf16.mxu0 0
    %70 = vmatpush1.bf16.msra.mxu0 0
    %71 = vmatprep.subr.bf16.mxu0 0
    %72 = vmatpush1.bf16.msra.mxu0 0
    %73 = vmatprep.subr.bf16.mxu0 0
    %74 = vmatpush1.bf16.msra.mxu0 0
    %75 = vmatprep.subr.bf16.mxu0 0
    %76 = vmatpush1.bf16.msra.mxu0 0
    %77 = vmatprep.subr.bf16.mxu0 0
    %78 = vmatpush1.bf16.msra.mxu0 0
    %79 = vmatprep.subr.bf16.mxu0 0
    %80 = vmatpush1.bf16.msra.mxu0 0
    %81 = vmatprep.mubr.bf16.mxu0 0
    %82 = vmatmul.mubr.bf16.gmra.mrb[0].mxu0 %v40
    %v83 = vpop.f32.mrb[0].mxu0
    %v84 = vadd.f32 %v36, %v83
    %v85 = vpop.f32.mrb[0].mxu0
    %v86 = vpop.f32.mrb[0].mxu0
    %v87 = vpop.f32.mrb[0].mxu0
    %88 = vdwg.mxu0
    %v89 = vtanh.pop %v84
    %v90 = vpack.c.bf16 %v89, %v89
    %v91 = vld [vmem:[%s3] sm:$0xf]
    %v92 = vld [vmem:[%s3 + $0x4] sm:$0xf]
    %v93 = vld [vmem:[%s3 + $0x8] sm:$0xf]
    %v94 = vld [vmem:[%s3 + $0xc] sm:$0xf]
    %v95 = vld [vmem:[%s3 + $0x10] sm:$0xf]
    %v96 = vld [vmem:[%s3 + $0x14] sm:$0xf]
    %v97 = vld [vmem:[%s3 + $0x18] sm:$0xf]
    %v98 = vld [vmem:[%s3 + $0x1c] sm:$0xf]
    %v99 = vld [vmem:[%s3 + $0x20] sm:$0xf]
    %v100 = vld [vmem:[%s3 + $0x24] sm:$0xf]
    %v101 = vld [vmem:[%s3 + $0x28] sm:$0xf]
    %v102 = vld [vmem:[%s3 + $0x2c] sm:$0xf]
    %v103 = vld [vmem:[%s3 + $0x30] sm:$0xf]
    %v104 = vld [vmem:[%s3 + $0x34] sm:$0xf]
    %v105 = vld [vmem:[%s3 + $0x38] sm:$0xf]
    %v106 = vld [vmem:[%s3 + $0x3c] sm:$0xf]
    %v107 = vld [vmem:[%s4] sm:$0x1]
    %v109 = vlaneseq
    %v110 = vshrl.u32 %v109, 7
    %v111 = vsub.s32 0, %v110
    %v112 = vrot.slane %v107, %v111
    %v130 = vunpack.c.l.b16 %v91
    %v131 = vunpack.c.l.b16 %v92
    %v132 = vunpack.c.l.b16 %v93
    %v133 = vunpack.c.l.b16 %v94
    %v134 = vunpack.c.l.b16 %v95
    %v135 = vunpack.c.l.b16 %v96
    %v136 = vunpack.c.l.b16 %v97
    %v137 = vunpack.c.l.b16 %v98
    %v138 = vunpack.c.l.b16 %v99
    %v139 = vunpack.c.l.b16 %v100
    %v140 = vunpack.c.l.b16 %v101
    %v141 = vunpack.c.l.b16 %v102
    %v142 = vunpack.c.l.b16 %v103
    %v143 = vunpack.c.l.b16 %v104
    %v144 = vunpack.c.l.b16 %v105
    %v145 = vunpack.c.l.b16 %v106
    %v146 = vpack.c.b16 %v131, %v130
    %v147 = vpack.c.b16 %v133, %v132
    %v148 = vpack.c.b16 %v135, %v134
    %v149 = vpack.c.b16 %v137, %v136
    %v150 = vpack.c.b16 %v139, %v138
    %v151 = vpack.c.b16 %v141, %v140
    %v152 = vpack.c.b16 %v143, %v142
    %v153 = vpack.c.b16 %v145, %v144
    %162 = vmatprep.subr.bf16.mxu0 0
    %163 = vmatpush1.bf16.msra.mxu0 %v146
    %164 = vmatprep.subr.bf16.mxu0 0
    %165 = vmatpush1.bf16.msra.mxu0 %v147
    %166 = vmatprep.subr.bf16.mxu0 0
    %167 = vmatpush1.bf16.msra.mxu0 %v148
    %168 = vmatprep.subr.bf16.mxu0 0
    %169 = vmatpush1.bf16.msra.mxu0 %v149
    %170 = vmatprep.subr.bf16.mxu0 0
    %171 = vmatpush1.bf16.msra.mxu0 %v150
    %172 = vmatprep.subr.bf16.mxu0 0
    %173 = vmatpush1.bf16.msra.mxu0 %v151
    %174 = vmatprep.subr.bf16.mxu0 0
    %175 = vmatpush1.bf16.msra.mxu0 %v152
    %176 = vmatprep.subr.bf16.mxu0 0
    %177 = vmatpush1.bf16.msra.mxu0 %v153
    %178 = vmatprep.subr.bf16.mxu0 0
    %179 = vmatpush1.bf16.msra.mxu0 0
    %180 = vmatprep.subr.bf16.mxu0 0
    %181 = vmatpush1.bf16.msra.mxu0 0
    %182 = vmatprep.subr.bf16.mxu0 0
    %183 = vmatpush1.bf16.msra.mxu0 0
    %184 = vmatprep.subr.bf16.mxu0 0
    %185 = vmatpush1.bf16.msra.mxu0 0
    %186 = vmatprep.subr.bf16.mxu0 0
    %187 = vmatpush1.bf16.msra.mxu0 0
    %188 = vmatprep.subr.bf16.mxu0 0
    %189 = vmatpush1.bf16.msra.mxu0 0
    %190 = vmatprep.subr.bf16.mxu0 0
    %191 = vmatpush1.bf16.msra.mxu0 0
    %192 = vmatprep.subr.bf16.mxu0 0
    %193 = vmatpush1.bf16.msra.mxu0 0
    %194 = vmatprep.mubr.bf16.mxu0 0
    %195 = vmatmul.mubr.bf16.gmra.mrb[0].mxu0 %v90
    %v196 = vpop.f32.mrb[0].mxu0
    %v197 = vadd.f32 %v112, %v196
    %v198 = vpop.f32.mrb[0].mxu0
    %v199 = vpop.f32.mrb[0].mxu0
    %v200 = vpop.f32.mrb[0].mxu0
    %201 = vdwg.mxu0
    %v202 = vtanh.pop %v197
    %v203 = vpack.c.bf16 %v202, %v202
    %v204 = vld [vmem:[%s5] sm:$0xf]
    %v205 = vld [vmem:[%s5 + $0x4] sm:$0xf]
    %v206 = vld [vmem:[%s5 + $0x8] sm:$0xf]
    %v207 = vld [vmem:[%s5 + $0xc] sm:$0xf]
    %v208 = vld [vmem:[%s5 + $0x10] sm:$0xf]
    %v209 = vld [vmem:[%s5 + $0x14] sm:$0xf]
    %v210 = vld [vmem:[%s5 + $0x18] sm:$0xf]
    %v211 = vld [vmem:[%s5 + $0x1c] sm:$0xf]
    %v212 = vld [vmem:[%s5 + $0x20] sm:$0xf]
    %v213 = vld [vmem:[%s5 + $0x24] sm:$0xf]
    %v214 = vld [vmem:[%s5 + $0x28] sm:$0xf]
    %v215 = vld [vmem:[%s5 + $0x2c] sm:$0xf]
    %v216 = vld [vmem:[%s5 + $0x30] sm:$0xf]
    %v217 = vld [vmem:[%s5 + $0x34] sm:$0xf]
    %v218 = vld [vmem:[%s5 + $0x38] sm:$0xf]
    %v219 = vld [vmem:[%s5 + $0x3c] sm:$0xf]
    %v220 = vld [vmem:[%s6] sm:$0x1]
    %v222 = vlaneseq
    %v223 = vshrl.u32 %v222, 7
    %v224 = vsub.s32 0, %v223
    %v225 = vrot.slane %v220, %v224
    %v243 = vunpack.c.l.b16 %v204
    %v244 = vunpack.c.l.b16 %v205
    %v245 = vunpack.c.l.b16 %v206
    %v246 = vunpack.c.l.b16 %v207
    %v247 = vunpack.c.l.b16 %v208
    %v248 = vunpack.c.l.b16 %v209
    %v249 = vunpack.c.l.b16 %v210
    %v250 = vunpack.c.l.b16 %v211
    %v251 = vunpack.c.l.b16 %v212
    %v252 = vunpack.c.l.b16 %v213
    %v253 = vunpack.c.l.b16 %v214
    %v254 = vunpack.c.l.b16 %v215
    %v255 = vunpack.c.l.b16 %v216
    %v256 = vunpack.c.l.b16 %v217
    %v257 = vunpack.c.l.b16 %v218
    %v258 = vunpack.c.l.b16 %v219
    %v259 = vpack.c.b16 %v244, %v243
    %v260 = vpack.c.b16 %v246, %v245
    %v261 = vpack.c.b16 %v248, %v247
    %v262 = vpack.c.b16 %v250, %v249
    %v263 = vpack.c.b16 %v252, %v251
    %v264 = vpack.c.b16 %v254, %v253
    %v265 = vpack.c.b16 %v256, %v255
    %v266 = vpack.c.b16 %v258, %v257
    %275 = vmatprep.subr.bf16.mxu0 0
    %276 = vmatpush1.bf16.msra.mxu0 %v259
    %277 = vmatprep.subr.bf16.mxu0 0
    %278 = vmatpush1.bf16.msra.mxu0 %v260
    %279 = vmatprep.subr.bf16.mxu0 0
    %280 = vmatpush1.bf16.msra.mxu0 %v261
    %281 = vmatprep.subr.bf16.mxu0 0
    %282 = vmatpush1.bf16.msra.mxu0 %v262
    %283 = vmatprep.subr.bf16.mxu0 0
    %284 = vmatpush1.bf16.msra.mxu0 %v263
    %285 = vmatprep.subr.bf16.mxu0 0
    %286 = vmatpush1.bf16.msra.mxu0 %v264
    %287 = vmatprep.subr.bf16.mxu0 0
    %288 = vmatpush1.bf16.msra.mxu0 %v265
    %289 = vmatprep.subr.bf16.mxu0 0
    %290 = vmatpush1.bf16.msra.mxu0 %v266
    %291 = vmatprep.subr.bf16.mxu0 0
    %292 = vmatpush1.bf16.msra.mxu0 0
    %293 = vmatprep.subr.bf16.mxu0 0
    %294 = vmatpush1.bf16.msra.mxu0 0
    %295 = vmatprep.subr.bf16.mxu0 0
    %296 = vmatpush1.bf16.msra.mxu0 0
    %297 = vmatprep.subr.bf16.mxu0 0
    %298 = vmatpush1.bf16.msra.mxu0 0
    %299 = vmatprep.subr.bf16.mxu0 0
    %300 = vmatpush1.bf16.msra.mxu0 0
    %301 = vmatprep.subr.bf16.mxu0 0
    %302 = vmatpush1.bf16.msra.mxu0 0
    %303 = vmatprep.subr.bf16.mxu0 0
    %304 = vmatpush1.bf16.msra.mxu0 0
    %305 = vmatprep.subr.bf16.mxu0 0
    %306 = vmatpush1.bf16.msra.mxu0 0
    %307 = vmatprep.mubr.bf16.mxu0 0
    %308 = vmatmul.mubr.bf16.gmra.mrb[0].mxu0 %v203
    %v309 = vpop.f32.mrb[0].mxu0
    %v310 = vadd.f32 %v225, %v309
    %v311 = vpop.f32.mrb[0].mxu0
    %v312 = vpop.f32.mrb[0].mxu0
    %v313 = vpop.f32.mrb[0].mxu0
    %314 = vdwg.mxu0
    %vm315 = vcmask 48128
    %316 = vst.msk [vmem:[#allocation2] sm:$0xff] %vm315, %v310
    // Predicated region
    $region30: #{tpu_custom_call.1} parent=1 // pred_check
      _
    $region31: #{tpu_custom_call.1} parent=1 // pred_check_branch
      %318 = sbr.rel (0) target = $region33
    $region32: #{tpu_custom_call.1} parent=1 // pred_region
      %s320 = ssub.s32 128, 128
      %321 = vsyncadd [#allocation3], %s320
      %s323 = sshll.u32 [#allocation2], 4
      %s324 = int_to_ptr.vmem [resolvable:$true] %s323
      %326 = dma.vmem_to_hbm [thread:$0]  %s324, 128, %s7, [#allocation3]
    $region33: #{tpu_custom_call.1} parent=1 // pred_fallthru
      _
    // Predicated region
    $region34: #{tpu_custom_call.1} parent=1 // pred_check
      _
    $region35: #{tpu_custom_call.1} parent=1 // pred_check_branch
      %328 = sbr.rel (0) target = $region37
    $region36: #{tpu_custom_call.1} parent=1 // pred_region
      %329 = dma.done [#allocation3], 128
    $region37: #{tpu_custom_call.1} parent=1 // pred_fallthru
      _
    %330 = vsyncpa [#allocation3], 1

</llo_original>
